<compile_context>
chip_gen: v7x
topology: tpu7x:2x2x1
jax: 0.10.0
libtpu: 0.0.40
codegen_flags: <defaults>
</compile_context>

<pallas_src>
import jax
import jax.numpy as jnp
from jax import lax
from jax.experimental import pallas as pl
from jax.experimental.pallas import tpu as pltpu

_SUB = 128  # sub-tile of tokens processed per inner matmul (keeps one-hot in vregs)


def _embedding_kernel(ids_ref, embT_ref, out_ref):
    # ids_ref : (1, TB)  int32  VMEM   (tokens on the lane axis)
    # embT_ref: (D, V)   f32    VMEM   (transposed table, constant-resident)
    # out_ref : (D, TB)  f32    VMEM   (lane-dense: tokens on the lane axis)
    d, v = embT_ref.shape
    tb = out_ref.shape[1]
    emb_t = embT_ref[...]                                     # hoist table load

    # Static sub-tiling: tb is a multiple of _SUB (both multiples of 128).
    for s in range(tb // _SUB):
        lo = s * _SUB
        ids_blk = ids_ref[:, lo:lo + _SUB]                    # (1, SUB) int32
        iota_v = lax.broadcasted_iota(jnp.int32, (v, _SUB), 0)
        # Sublane-broadcast compare -> (V, SUB) one-hot, no cross-lane shuffle.
        onehot = (ids_blk == iota_v).astype(emb_t.dtype)
        out_ref[:, lo:lo + _SUB] = jnp.dot(
            emb_t, onehot, preferred_element_type=jnp.float32
        ).astype(out_ref.dtype)


def peptide_embeddings(x, emb, *, max_tb=512):
    """x: (B, S) integer token ids, emb: (V, D) float32 -> (B, S, D) float32."""
    B, S = x.shape
    V, D = emb.shape
    N = B * S

    # Token block: as large as max_tb, but no larger than the lane-aligned token
    # count (avoids over-padding tiny inputs).  Always a multiple of 128.
    n_lane_aligned = pl.cdiv(N, 128) * 128
    tb = min(max_tb, n_lane_aligned)
    n_blocks = pl.cdiv(N, tb)
    n_pad = n_blocks * tb
    # (v7x note: for large N, n_blocks >= 2 so the "parallel" grid axis shards
    #  across both TensorCores; the tiny table is simply duplicated per core.)

    ids_flat = x.reshape(-1).astype(jnp.int32)
    if n_pad == N:
        ids = ids_flat.reshape(1, n_pad)                      # no padding copy
    else:
        ids = jnp.zeros((1, n_pad), jnp.int32).at[0, :N].set(ids_flat)

    emb_t = emb.T                                             # (D, V)

    out_t = pl.pallas_call(
        _embedding_kernel,
        out_shape=jax.ShapeDtypeStruct((D, n_pad), emb.dtype),
        grid_spec=pl.GridSpec(
            grid=(n_blocks,),
            in_specs=[
                pl.BlockSpec((1, tb), lambda i: (0, i)),      # token-id block
                pl.BlockSpec((D, V), lambda i: (0, 0)),       # full table (D, V)
            ],
            out_specs=pl.BlockSpec((D, tb), lambda i: (0, i)),  # lane-dense out
        ),
        compiler_params=pltpu.CompilerParams(
            dimension_semantics=("parallel",)
        ),
    )(ids, emb_t)

    if n_pad != N:
        out_t = out_t[:, :N]
    # Hand back the PyTorch layout; the transpose stays in the XLA wrapper.
    return out_t.T.reshape(B, S, D)


if __name__ == "__main__":
    key = jax.random.PRNGKey(0)
    k_emb, k_ids = jax.random.split(key)

    V = 21   # 20 amino acids + padding token 0
    D = 32   # embedding dim
    B, S = 2, 8

    # Deterministic "pretrained" embedding table; row 0 is the padding row.
    emb = jax.random.normal(k_emb, (V, D), dtype=jnp.float32)
    emb = emb.at[0].set(0.0)

    # Deterministic peptide token ids (0 = pad allowed).
    x = jax.random.randint(k_ids, (B, S), minval=0, maxval=V, dtype=jnp.int32)

    out = peptide_embeddings(x, emb)
    out = jax.block_until_ready(out)

    # Reference check (plain gather).
    ref = jnp.take(emb, x, axis=0)
    assert out.shape == (B, S, D)
    assert jnp.allclose(out, ref, atol=1e-6), "mismatch vs reference gather"

    print("KERNEL_OK")
</pallas_src>

<mosaic_0001>
module attributes {stable_mosaic.version = 11 : i64} {
  func.func @_embedding_kernel(%arg0: i32, %arg1: memref<1x128xi32, #tpu.memory_space<vmem>>, %arg2: memref<32x21xf32, #tpu.memory_space<vmem>>, %arg3: memref<32x128xf32, #tpu.memory_space<vmem>>) attributes {dimension_semantics = [#tpu.dimension_semantics<parallel>], iteration_bounds = array<i64: 1>, scalar_prefetch = 0 : i64, scratch_operands = 0 : i64, tpu.core_type = #tpu.core_type<tc>, window_params = [{transform_indices = @transform_0, window_bounds = array<i64: 1, 128>}, {pipeline_mode = #tpu.pipeline_mode<synchronous>, transform_indices = @transform_1, window_bounds = array<i64: 32, 21>}, {transform_indices = @transform_2, window_bounds = array<i64: 32, 128>}]} {
    %c0 = arith.constant 0 : index
    %c0_0 = arith.constant 0 : index
    %0 = vector.load %arg2[%c0, %c0_0] : memref<32x21xf32, #tpu.memory_space<vmem>>, vector<32x21xf32>
    %c0_1 = arith.constant 0 : index
    %c0_2 = arith.constant 0 : index
    %1 = vector.load %arg1[%c0_1, %c0_2] : memref<1x128xi32, #tpu.memory_space<vmem>>, vector<1x128xi32>
    %2 = tpu.iota {dimensions = array<i32: 0>} : vector<21x128xi32>
    %3 = vector.broadcast %1 : vector<1x128xi32> to vector<21x128xi32>
    %4 = arith.cmpi eq, %3, %2 : vector<21x128xi32>
    %5 = arith.extui %4 : vector<21x128xi1> to vector<21x128xi32>
    %6 = arith.sitofp %5 : vector<21x128xi32> to vector<21x128xf32>
    %cst = arith.constant dense<0.000000e+00> : vector<32x128xf32>
    %7 = tpu.matmul %0, %6, %cst {dimension_numbers = #tpu.dot_dimension_numbers<[1], [0], [0], [1], [0, 0, 1, 1], [], []>} : vector<32x21xf32>, vector<21x128xf32>, vector<32x128xf32> -> vector<32x128xf32>
    %c0_3 = arith.constant 0 : index
    %c0_4 = arith.constant 0 : index
    %8 = vector.load %arg3[%c0_3, %c0_4] : memref<32x128xf32, #tpu.memory_space<vmem>>, vector<32x128xf32>
    tpu.vector_store %arg3[%c0_3, %c0_4], %7 {strides = array<i32>} : memref<32x128xf32, #tpu.memory_space<vmem>>, vector<32x128xf32>,
    return
  }
  func.func @transform_0(%arg0: i32) -> (i32, i32) {
    %c0_i32 = arith.constant 0 : i32
    %c0_i32_0 = arith.constant 0 : i32
    return %c0_i32, %arg0 : i32, i32
  }
  func.func @transform_1(%arg0: i32) -> (i32, i32) {
    %c0_i32 = arith.constant 0 : i32
    %c0_i32_0 = arith.constant 0 : i32
    %c0_i32_1 = arith.constant 0 : i32
    return %c0_i32, %c0_i32_0 : i32, i32
  }
  func.func @transform_2(%arg0: i32) -> (i32, i32) {
    %c0_i32 = arith.constant 0 : i32
    %c0_i32_0 = arith.constant 0 : i32
    return %c0_i32, %arg0 : i32, i32
  }
}

</mosaic_0001>

<llo_original>
// kernel: tpu_custom_call.1
$region0: #{tpu_custom_call.1}
  #allocation0 [shape = 'u32[]', space=smem, size = 0x4, offset = 0x4, fixed_abs, tag = 'smem constant byte address 0x4 - core index']
  #allocation1 [shape = 'u32[144,128]{1,0:T(1,128)}', space=vmem, size = 0x12000, scoped, tag = 'internal scratch']
  %s0 = inlined_call_operand.vmem [shape: s32[1,128], index: 0, kind: input, shape index: {}]
  %s1 = inlined_call_operand.vmem [shape: f32[32,21], index: 1, kind: input, shape index: {}]
  %s2 = inlined_call_operand.hbm [shape: f32[32,128], index: 2, kind: output, shape index: {}]
  %s3 = sld [smem:[#allocation0]]
  $region18: #{tpu_custom_call.1} parent=0
    _
  %s5 = ssub.s32 1, %s3
  %s6 = scalar_select 0, %s5, %s3
  $region1: #{tpu_custom_call.1} parent=0
    #allocation2 [shape = 'u8[16384]{0}', space=vmem, size = 0x4000, scoped, tag = 'output window, operand 0, single buffered']
    #allocation3 [shape = 's32[1]{0}', space=sflag, size = 0x4, scoped, tag = 'scoped memory for tpu_custom_call.1']
    %7 = vsyncpa [#allocation3], 0
    // Predicated region
    $region2: #{tpu_custom_call.1} parent=1 // pred_check
      _
    $region3: #{tpu_custom_call.1} parent=1 // pred_check_branch
      %9 = sbr.rel (0) target = $region5
    $region4: #{tpu_custom_call.1} parent=1 // pred_region
      _
    $region5: #{tpu_custom_call.1} parent=1 // pred_fallthru
      _
    // Predicated region
    $region6: #{tpu_custom_call.1} parent=1 // pred_check
      _
    $region7: #{tpu_custom_call.1} parent=1 // pred_check_branch
      %11 = sbr.rel (0) target = $region9
    $region8: #{tpu_custom_call.1} parent=1 // pred_region
      _
    $region9: #{tpu_custom_call.1} parent=1 // pred_fallthru
      _
    %v12 = vld [vmem:[%s1] sm:$0xff]
    %v13 = vld [vmem:[%s1 + $0x8] sm:$0xff]
    %v14 = vld [vmem:[%s1 + $0x10] sm:$0xff]
    %v15 = vld [vmem:[%s1 + $0x18] sm:$0xff]
    %v16 = vld [vmem:[%s0] sm:$0x1]
    %v17 = vlaneseq
    %v18 = vshrl.u32 %v17, 7
    %v19 = vadd.s32 %v18, 8
    %v20 = vadd.s32 %v18, 16
    %v21 = vlaneseq
    %v22 = vshrl.u32 %v21, 7
    %v23 = vsub.s32 0, %v22
    %v24 = vrot.slane %v16, %v23
    %vm25 = vcmp.eq.s32.totalorder %v24, %v18
    %vm26 = vcmp.eq.s32.totalorder %v24, %v19
    %vm27 = vcmp.eq.s32.totalorder %v24, %v20
    %v28 = vsel %vm25, 1, 0
    %v29 = vsel %vm26, 1, 0
    %v30 = vsel %vm27, 1, 0
    %v31 = vcvt.s32.f32 %v28
    %v32 = vcvt.s32.f32 %v29
    %v33 = vcvt.s32.f32 %v30
    %vm34 = vcmask 171008
    %v36 = vsel %vm34, %v12, 0
    %v39 = vsel %vm34, %v13, 0
    %v42 = vsel %vm34, %v14, 0
    %v45 = vsel %vm34, %v15, 0
    %vm47 = vcmask 1044480
    %v49 = vsel %vm47, %v33, 0
    %51 = vmatprep.subr.mxu0 0.0
    %52 = vmatpush1.msra.mxu0 %v31
    %53 = vmatprep.subr.mxu0 0.0
    %54 = vmatpush1.msra.mxu0 %v32
    %55 = vmatprep.subr.mxu0 0.0
    %56 = vmatpush1.msra.mxu0 %v49
    %57 = vmatprep.subr.mxu0 0.0
    %58 = vmatpush1.msra.mxu0 0.0
    %59 = vmatprep.subr.mxu0 0.0
    %60 = vmatpush1.msra.mxu0 0.0
    %61 = vmatprep.subr.mxu0 0.0
    %62 = vmatpush1.msra.mxu0 0.0
    %63 = vmatprep.subr.mxu0 0.0
    %64 = vmatpush1.msra.mxu0 0.0
    %65 = vmatprep.subr.mxu0 0.0
    %66 = vmatpush1.msra.mxu0 0.0
    %67 = vmatprep.subr.mxu0 0.0
    %68 = vmatpush1.msra.mxu0 0.0
    %69 = vmatprep.subr.mxu0 0.0
    %70 = vmatpush1.msra.mxu0 0.0
    %71 = vmatprep.subr.mxu0 0.0
    %72 = vmatpush1.msra.mxu0 0.0
    %73 = vmatprep.subr.mxu0 0.0
    %74 = vmatpush1.msra.mxu0 0.0
    %75 = vmatprep.subr.mxu0 0.0
    %76 = vmatpush1.msra.mxu0 0.0
    %77 = vmatprep.subr.mxu0 0.0
    %78 = vmatpush1.msra.mxu0 0.0
    %79 = vmatprep.subr.mxu0 0.0
    %80 = vmatpush1.msra.mxu0 0.0
    %81 = vmatprep.subr.mxu0 0.0
    %82 = vmatpush1.msra.mxu0 0.0
    %83 = vmatprep.subr.mxu0 0.0
    %84 = vmatpush1.msra.mxu0 0.0
    %85 = vmatprep.subr.mxu0 0.0
    %86 = vmatpush1.msra.mxu0 0.0
    %87 = vmatprep.subr.mxu0 0.0
    %88 = vmatpush1.msra.mxu0 0.0
    %89 = vmatprep.subr.mxu0 0.0
    %90 = vmatpush1.msra.mxu0 0.0
    %91 = vmatprep.subr.mxu0 0.0
    %92 = vmatpush1.msra.mxu0 0.0
    %93 = vmatprep.subr.mxu0 0.0
    %94 = vmatpush1.msra.mxu0 0.0
    %95 = vmatprep.subr.mxu0 0.0
    %96 = vmatpush1.msra.mxu0 0.0
    %97 = vmatprep.subr.mxu0 0.0
    %98 = vmatpush1.msra.mxu0 0.0
    %99 = vmatprep.subr.mxu0 0.0
    %100 = vmatpush1.msra.mxu0 0.0
    %101 = vmatprep.subr.mxu0 0.0
    %102 = vmatpush1.msra.mxu0 0.0
    %103 = vmatprep.subr.mxu0 0.0
    %104 = vmatpush1.msra.mxu0 0.0
    %105 = vmatprep.subr.mxu0 0.0
    %106 = vmatpush1.msra.mxu0 0.0
    %107 = vmatprep.subr.mxu0 0.0
    %108 = vmatpush1.msra.mxu0 0.0
    %109 = vmatprep.subr.mxu0 0.0
    %110 = vmatpush1.msra.mxu0 0.0
    %111 = vmatprep.subr.mxu0 0.0
    %112 = vmatpush1.msra.mxu0 0.0
    %113 = vmatprep.subr.mxu0 0.0
    %114 = vmatpush1.msra.mxu0 0.0
    %115 = vmatprep.mubr.f32.mxu0 0.0
    %116 = vmatmul.mubr.f32.gmra.mrb[0].mxu0 %v36
    %v117 = vpop.f32.mrb[0].mxu0
    %v118 = vadd.f32 0.0, %v117
    %v119 = vpop.f32.mrb[0].mxu0
    %120 = vmatprep.mubr.f32.mxu0 0.0
    %121 = vmatmul.mubr.f32.gmra.mrb[0].mxu0 %v39
    %v122 = vpop.f32.mrb[0].mxu0
    %v123 = vadd.f32 0.0, %v122
    %v124 = vpop.f32.mrb[0].mxu0
    %125 = vmatprep.mubr.f32.mxu0 0.0
    %126 = vmatmul.mubr.f32.gmra.mrb[0].mxu0 %v42
    %v127 = vpop.f32.mrb[0].mxu0
    %v128 = vadd.f32 0.0, %v127
    %v129 = vpop.f32.mrb[0].mxu0
    %130 = vmatprep.mubr.f32.mxu0 0.0
    %131 = vmatmul.mubr.f32.gmra.mrb[0].mxu0 %v45
    %v132 = vpop.f32.mrb[0].mxu0
    %v133 = vadd.f32 0.0, %v132
    %v134 = vpop.f32.mrb[0].mxu0
    %135 = vdwg.mxu0
    %136 = vst [vmem:[#allocation2] sm:$0xff] %v118
    %137 = vst [vmem:[#allocation2 + $0x8] sm:$0xff] %v123
    %138 = vst [vmem:[#allocation2 + $0x10] sm:$0xff] %v128
    %139 = vst [vmem:[#allocation2 + $0x18] sm:$0xff] %v133
    // Predicated region
    $region10: #{tpu_custom_call.1} parent=1 // pred_check
      _
    $region11: #{tpu_custom_call.1} parent=1 // pred_check_branch
      %141 = sbr.rel (0) target = $region13
    $region12: #{tpu_custom_call.1} parent=1 // pred_region
      %s143 = ssub.s32 512, 512
      %144 = vsyncadd [#allocation3], %s143
      %s145 = sshll.u32 [#allocation2], 4
      %s146 = int_to_ptr.vmem [resolvable:$true] %s145
      %151 = dma.vmem_to_hbm [thread:$0]  %s146, 512, %s2, [#allocation3], 128, 128, 8
    $region13: #{tpu_custom_call.1} parent=1 // pred_fallthru
      _
    // Predicated region
    $region14: #{tpu_custom_call.1} parent=1 // pred_check
      _
    $region15: #{tpu_custom_call.1} parent=1 // pred_check_branch
      %153 = sbr.rel (0) target = $region17
    $region16: #{tpu_custom_call.1} parent=1 // pred_region
      %154 = dma.done [#allocation3], 512
    $region17: #{tpu_custom_call.1} parent=1 // pred_fallthru
      _
    %155 = vsyncpa [#allocation3], 1

</llo_original>
